<compile_context>
chip_gen: v5e
topology: v5e:2x2
jax: 0.10.0
libtpu: 0.0.40
codegen_flags: <defaults>
</compile_context>

<pallas_src>
import functools

import jax
import jax.numpy as jnp
import numpy as np
from jax.experimental import pallas as pl
from jax.experimental.pallas import tpu as pltpu


def _round_up(v, m):
    return (v + m - 1) // m * m


def _conv1d_kernel(x_ref, w_ref, b_ref, o_ref, *, dilation):
    # x_ref: (1, T_x, C_in)  per-batch slab (resident across row/cout tiles)
    # w_ref: (K, C_in, TN)   weights for this C_out tile (resident across row tiles)
    # b_ref: (1, TN)         f32 bias slice
    # o_ref: (1, TM, TN)
    TM = o_ref.shape[1]
    K = w_ref.shape[0]

    # First output row of this tile; multiple of 8 -> sublane-aligned tap-0 load.
    t0 = pl.multiple_of(pl.program_id(2) * TM, 8)

    acc = jnp.dot(x_ref[0, pl.ds(t0, TM), :], w_ref[0],
                  preferred_element_type=jnp.float32)
    # K is small and static -> fully unrolled, all MXU matmuls, f32 accumulation.
    for k in range(1, K):
        acc += jnp.dot(x_ref[0, pl.ds(t0 + k * dilation, TM), :], w_ref[k],
                       preferred_element_type=jnp.float32)

    acc += b_ref[...].astype(jnp.float32)          # (1, TN) broadcasts over rows
    o_ref[0] = acc.astype(o_ref.dtype)


def conv_forward(x, weight, bias=None, *, stride=1, padding=0, dilation=1,
                 tile_m=256):
    """Forward of the PyTorch `Conv` module.

    x:      (B, T, C_in)
    weight: (C_out, C_in, K)   (PyTorch Conv1d layout)
    bias:   (C_out,) or None
    Returns (B, T_out, C_out), T_out = (T + 2*padding - dilation*(K-1) - 1)//stride + 1
    """
    B, T, C_in = x.shape
    C_out, C_in_w, K = weight.shape
    assert C_in == C_in_w, "channel mismatch"
    assert stride == 1  # TODO(synk): stride > 1 needs strided loads; module default is 1.

    T_out = (T + 2 * padding - dilation * (K - 1) - 1) // stride + 1
    assert T_out > 0, "invalid conv geometry"

    # ---- row (time) tiling: prefer a tile that divides T_out exactly so the
    #      output needs no padded rows and no final slice (saves an HBM pass).
    tm = min(tile_m, _round_up(T_out, 8))
    if T_out % tm != 0:
        for cand in (tile_m, 192, 128, 96, 64):
            if cand <= tile_m and cand % 8 == 0 and T_out % cand == 0:
                tm = cand
                break
    T_out_p = _round_up(T_out, tm)
    MT = T_out_p // tm

    # ---- C_out tiling: bound resident weight VMEM / keep lane-dense stores for
    #      large channel counts; degenerate to a single tile otherwise.
    if C_out > 256 and C_out % 256 == 0:
        tn = 256
    elif C_out > 256 and C_out % 128 == 0:
        tn = 128
    else:
        tn = C_out
    NT = C_out // tn

    # Rows of (time-padded) input the kernel touches.
    T_x = T_out_p + dilation * (K - 1)

    # ---- input: zero-copy when no conv padding and no tail rows are needed
    #      (e.g. the module default kernel_size=1, padding=0).  Otherwise pad the
    #      time axis only -- channels are never padded.
    if padding == 0 and T_x == T:
        x_in = x
    else:
        x_in = jnp.zeros((B, T_x, C_in), x.dtype)
        x_in = x_in.at[:, padding:padding + T, :].set(x)

    # Weights as (K, C_in, C_out): each tap is a plain (C_in, C_out) matmul RHS.
    w = jnp.transpose(weight, (2, 1, 0)).astype(x.dtype)
    b_arr = (bias.astype(jnp.float32).reshape(1, C_out) if bias is not None
             else jnp.zeros((1, C_out), jnp.float32))

    itemsize = np.dtype(x.dtype).itemsize

    # ---- VMEM budget from the actual resident buffers (double-buffered worst case),
    #      capped by the chip's real VMEM capacity (64 MiB on v7x, 128 MiB v5e/v6e).
    vmem_needed = 2 * (T_x * C_in * itemsize          # per-batch x slab
                       + K * C_in * tn * itemsize     # weight tile
                       + tm * tn * itemsize           # output tile
                       + tn * 4)                      # bias tile
    vmem_needed += tm * tn * 4 + (4 << 20)            # f32 acc + headroom
    try:
        vmem_cap = int(pltpu.get_tpu_info().vmem_capacity_bytes)
    except Exception:
        vmem_cap = 64 * 1024 * 1024
    vmem_limit = int(min(max(vmem_needed, 32 * 1024 * 1024), vmem_cap))

    cost = pl.CostEstimate(
        flops=2 * B * T_out * K * C_in * C_out,
        transcendentals=0,
        bytes_accessed=int(B * T * C_in * itemsize + K * C_in * C_out * itemsize
                           + C_out * 4 + B * T_out * C_out * itemsize))

    out = pl.pallas_call(
        functools.partial(_conv1d_kernel, dilation=dilation),
        out_shape=jax.ShapeDtypeStruct((B, T_out_p, C_out), x.dtype),
        grid_spec=pltpu.PrefetchScalarGridSpec(
            num_scalar_prefetch=0,
            # batch outermost (big x slab stays resident), C_out tile next
            # (weight tile reused across every row tile), row tile innermost.
            grid=(B, NT, MT),
            in_specs=[
                pl.BlockSpec((1, T_x, C_in), lambda bi, ni, mi: (bi, 0, 0)),
                pl.BlockSpec((K, C_in, tn), lambda bi, ni, mi: (0, 0, ni)),
                pl.BlockSpec((1, tn), lambda bi, ni, mi: (0, ni)),
            ],
            out_specs=pl.BlockSpec((1, tm, tn), lambda bi, ni, mi: (bi, mi, ni)),
        ),
        compiler_params=pltpu.CompilerParams(
            dimension_semantics=("parallel", "parallel", "parallel"),
            vmem_limit_bytes=vmem_limit),
        cost_estimate=cost,
    )(x_in, w, b_arr)

    if T_out_p != T_out:
        out = out[:, :T_out, :]
    return out


def _ref_conv(xn, wn, bn, padding, dilation):
    B, T, C_in = xn.shape
    C_out, _, K = wn.shape
    xp = np.pad(xn, ((0, 0), (padding, padding), (0, 0)))
    T_out = T + 2 * padding - dilation * (K - 1)
    ref = np.zeros((B, T_out, C_out), np.float32)
    for k in range(K):
        ref += np.einsum('btc,oc->bto',
                         xp[:, k * dilation:k * dilation + T_out, :],
                         wn[:, :, k])
    if bn is not None:
        ref += bn[None, None, :]
    return ref


if __name__ == "__main__":
    key = jax.random.PRNGKey(0)
    k1, k2, k3, k4, k5 = jax.random.split(key, 5)

    # Small shapes consistent with the module: batch=2, seq=16, in=32, out=64.
    B, T, C_in, C_out = 2, 16, 32, 64
    x = jax.random.normal(k1, (B, T, C_in), dtype=jnp.float32)
    bias = 0.1 * jax.random.normal(k3, (C_out,), dtype=jnp.float32)

    # Case 1: kernel_size=3, padding=1 (typical FastSpeech conv) -> time-padded slab.
    K, pad = 3, 1
    w3 = jax.random.normal(k2, (C_out, C_in, K), dtype=jnp.float32) / np.sqrt(C_in * K)
    out3 = jax.block_until_ready(conv_forward(x, w3, bias, padding=pad))
    ref3 = _ref_conv(np.asarray(x), np.asarray(w3), np.asarray(bias), pad, 1)
    np.testing.assert_allclose(np.asarray(out3), ref3, atol=1e-4, rtol=1e-4)

    # Case 2: module defaults (kernel_size=1, padding=0) -> fully zero-copy path.
    w1 = jax.random.normal(k4, (C_out, C_in, 1), dtype=jnp.float32) / np.sqrt(C_in)
    out1 = jax.block_until_ready(conv_forward(x, w1, bias))
    ref1 = _ref_conv(np.asarray(x), np.asarray(w1), np.asarray(bias), 0, 1)
    np.testing.assert_allclose(np.asarray(out1), ref1, atol=1e-4, rtol=1e-4)

    # Case 3: dilation=2, ragged T, non-128 C_out (exercises tail pad + time slice).
    B3, T3, Ci3, Co3, K3, d3, p3 = 2, 20, 32, 48, 3, 2, 2
    x3 = jax.random.normal(k5, (B3, T3, Ci3), dtype=jnp.float32)
    w5 = jax.random.normal(k2, (Co3, Ci3, K3), dtype=jnp.float32) / np.sqrt(Ci3 * K3)
    b5 = 0.1 * jax.random.normal(k3, (Co3,), dtype=jnp.float32)
    outd = jax.block_until_ready(conv_forward(x3, w5, b5, padding=p3, dilation=d3))
    refd = _ref_conv(np.asarray(x3), np.asarray(w5), np.asarray(b5), p3, d3)
    np.testing.assert_allclose(np.asarray(outd), refd, atol=1e-4, rtol=1e-4)

    print("KERNEL_OK")
</pallas_src>

<mosaic_0001>
module attributes {stable_mosaic.version = 11 : i64} {
  func.func @_conv1d_kernel(%arg0: i32, %arg1: i32, %arg2: i32, %arg3: memref<1x18x32xf32, #tpu.memory_space<vmem>>, %arg4: memref<3x32x64xf32, #tpu.memory_space<vmem>>, %arg5: memref<1x64xf32, #tpu.memory_space<vmem>>, %arg6: memref<1x16x64xf32, #tpu.memory_space<vmem>>) attributes {dimension_semantics = [#tpu.dimension_semantics<parallel>, #tpu.dimension_semantics<parallel>, #tpu.dimension_semantics<parallel>], iteration_bounds = array<i64: 2, 1, 1>, scalar_prefetch = 0 : i64, scratch_operands = 0 : i64, tpu.core_type = #tpu.core_type<tc>, window_params = [{transform_indices = @transform_0, window_bounds = array<i64: 1, 18, 32>}, {transform_indices = @transform_1, window_bounds = array<i64: 3, 32, 64>}, {transform_indices = @transform_2, window_bounds = array<i64: 1, 64>}, {transform_indices = @transform_3, window_bounds = array<i64: 1, 16, 64>}]} {
    %c16_i32 = arith.constant 16 : i32
    %0 = arith.muli %arg2, %c16_i32 : i32
    %1 = tpu.assume_multiple %0, 8 : i32
    %c0 = arith.constant 0 : index
    %2 = arith.index_cast %1 : i32 to index
    %c0_0 = arith.constant 0 : index
    %3 = vector.load %arg3[%c0, %2, %c0_0] : memref<1x18x32xf32, #tpu.memory_space<vmem>>, vector<1x16x32xf32>
    %4 = vector.shape_cast %3 : vector<1x16x32xf32> to vector<16x32xf32>
    %c0_1 = arith.constant 0 : index
    %c0_2 = arith.constant 0 : index
    %c0_3 = arith.constant 0 : index
    %5 = vector.load %arg4[%c0_1, %c0_2, %c0_3] : memref<3x32x64xf32, #tpu.memory_space<vmem>>, vector<1x32x64xf32>
    %6 = vector.shape_cast %5 : vector<1x32x64xf32> to vector<32x64xf32>
    %cst = arith.constant dense<0.000000e+00> : vector<16x64xf32>
    %7 = tpu.matmul %4, %6, %cst {dimension_numbers = #tpu.dot_dimension_numbers<[1], [0], [0], [1], [0, 0, 1, 1], [], []>} : vector<16x32xf32>, vector<32x64xf32>, vector<16x64xf32> -> vector<16x64xf32>
    %c1_i32 = arith.constant 1 : i32
    %8 = arith.addi %1, %c1_i32 : i32
    %c0_4 = arith.constant 0 : index
    %9 = arith.index_cast %8 : i32 to index
    %c0_5 = arith.constant 0 : index
    %10 = vector.load %arg3[%c0_4, %9, %c0_5] : memref<1x18x32xf32, #tpu.memory_space<vmem>>, vector<1x16x32xf32>
    %11 = vector.shape_cast %10 : vector<1x16x32xf32> to vector<16x32xf32>
    %c1 = arith.constant 1 : index
    %c0_6 = arith.constant 0 : index
    %c0_7 = arith.constant 0 : index
    %12 = vector.load %arg4[%c1, %c0_6, %c0_7] : memref<3x32x64xf32, #tpu.memory_space<vmem>>, vector<1x32x64xf32>
    %13 = vector.shape_cast %12 : vector<1x32x64xf32> to vector<32x64xf32>
    %cst_8 = arith.constant dense<0.000000e+00> : vector<16x64xf32>
    %14 = tpu.matmul %11, %13, %cst_8 {dimension_numbers = #tpu.dot_dimension_numbers<[1], [0], [0], [1], [0, 0, 1, 1], [], []>} : vector<16x32xf32>, vector<32x64xf32>, vector<16x64xf32> -> vector<16x64xf32>
    %15 = arith.addf %7, %14 : vector<16x64xf32>
    %c2_i32 = arith.constant 2 : i32
    %16 = arith.addi %1, %c2_i32 : i32
    %c0_9 = arith.constant 0 : index
    %17 = arith.index_cast %16 : i32 to index
    %c0_10 = arith.constant 0 : index
    %18 = vector.load %arg3[%c0_9, %17, %c0_10] : memref<1x18x32xf32, #tpu.memory_space<vmem>>, vector<1x16x32xf32>
    %19 = vector.shape_cast %18 : vector<1x16x32xf32> to vector<16x32xf32>
    %c2 = arith.constant 2 : index
    %c0_11 = arith.constant 0 : index
    %c0_12 = arith.constant 0 : index
    %20 = vector.load %arg4[%c2, %c0_11, %c0_12] : memref<3x32x64xf32, #tpu.memory_space<vmem>>, vector<1x32x64xf32>
    %21 = vector.shape_cast %20 : vector<1x32x64xf32> to vector<32x64xf32>
    %cst_13 = arith.constant dense<0.000000e+00> : vector<16x64xf32>
    %22 = tpu.matmul %19, %21, %cst_13 {dimension_numbers = #tpu.dot_dimension_numbers<[1], [0], [0], [1], [0, 0, 1, 1], [], []>} : vector<16x32xf32>, vector<32x64xf32>, vector<16x64xf32> -> vector<16x64xf32>
    %23 = arith.addf %15, %22 : vector<16x64xf32>
    %c0_14 = arith.constant 0 : index
    %c0_15 = arith.constant 0 : index
    %24 = vector.load %arg5[%c0_14, %c0_15] : memref<1x64xf32, #tpu.memory_space<vmem>>, vector<1x64xf32>
    %25 = vector.broadcast %24 : vector<1x64xf32> to vector<16x64xf32>
    %26 = arith.addf %23, %25 : vector<16x64xf32>
    %c0_16 = arith.constant 0 : index
    %c0_17 = arith.constant 0 : index
    %c0_18 = arith.constant 0 : index
    %27 = vector.load %arg6[%c0_16, %c0_17, %c0_18] : memref<1x16x64xf32, #tpu.memory_space<vmem>>, vector<1x16x64xf32>
    %28 = vector.shape_cast %27 : vector<1x16x64xf32> to vector<16x64xf32>
    %29 = vector.shape_cast %26 : vector<16x64xf32> to vector<1x16x64xf32>
    tpu.vector_store %arg6[%c0_16, %c0_17, %c0_18], %29 {strides = array<i32>} : memref<1x16x64xf32, #tpu.memory_space<vmem>>, vector<1x16x64xf32>,
    return
  }
  func.func @transform_0(%arg0: i32, %arg1: i32, %arg2: i32) -> (i32, i32, i32) {
    %c0_i32 = arith.constant 0 : i32
    %c0_i32_0 = arith.constant 0 : i32
    %c0_i32_1 = arith.constant 0 : i32
    return %arg0, %c0_i32, %c0_i32_0 : i32, i32, i32
  }
  func.func @transform_1(%arg0: i32, %arg1: i32, %arg2: i32) -> (i32, i32, i32) {
    %c0_i32 = arith.constant 0 : i32
    %c0_i32_0 = arith.constant 0 : i32
    %c0_i32_1 = arith.constant 0 : i32
    return %c0_i32, %c0_i32_0, %arg1 : i32, i32, i32
  }
  func.func @transform_2(%arg0: i32, %arg1: i32, %arg2: i32) -> (i32, i32) {
    %c0_i32 = arith.constant 0 : i32
    %c0_i32_0 = arith.constant 0 : i32
    return %c0_i32, %arg1 : i32, i32
  }
  func.func @transform_3(%arg0: i32, %arg1: i32, %arg2: i32) -> (i32, i32, i32) {
    %c0_i32 = arith.constant 0 : i32
    return %arg0, %arg2, %arg1 : i32, i32, i32
  }
}

</mosaic_0001>

<llo_original>
// kernel: tpu_custom_call.1
$region0: #{tpu_custom_call.1}
  #allocation0 [shape = 'u32[]', space=smem, size = 0x4, offset = 0x4, fixed_abs, tag = 'smem constant byte address 0x4 - core index']
  #allocation1 [shape = 'u32[72,128]{1,0:T(1,128)}', space=vmem, size = 0x9000, scoped, tag = 'internal scratch']
  %s0 = inlined_call_operand.vmem [shape: f32[2,18,32], index: 0, kind: input, shape index: {}]
  %s1 = inlined_call_operand.hbm [shape: f32[3,32,64], index: 1, kind: input, shape index: {}]
  %s2 = inlined_call_operand.vmem [shape: f32[1,64], index: 2, kind: input, shape index: {}]
  %s3 = inlined_call_operand.hbm [shape: f32[2,16,64], index: 3, kind: output, shape index: {}]
  %s4 = sld [smem:[#allocation0]]
  $region49: #{tpu_custom_call.1} parent=0
    _
  %s6 = ssub.s32 1, %s4
  %s7 = scalar_select 0, %s6, %s4
  $region1: #{tpu_custom_call.1} parent=0
    #allocation2 [shape = 'u8[49152]{0}', space=vmem, size = 0xc000, scoped, tag = 'input window, operand 1, single buffered']
    #allocation3 [shape = 's32[2]{0}', space=sflag, size = 0x8, scoped, tag = 'scoped memory for tpu_custom_call.1']
    #allocation4 [shape = 's32[2]{0}', space=sflag, size = 0x8, scoped, tag = 'scoped memory for tpu_custom_call.1']
    #allocation5 [shape = 'u8[16384]{0}', space=vmem, size = 0x4000, scoped, tag = 'output window, operand 0']
    %8 = vsyncpa [#allocation3], 0
    %9 = vsyncpa [#allocation4], 0
    %s10 = scalar_lea.sflag [#allocation4], 1
    %11 = vsyncpa %s10, 0
    loop: start=0, step=1, limit=4
    $region2: #{tpu_custom_call.1} parent=1 // loop_pre_header
      _
    $region3: #{tpu_custom_call.1} parent=1 // loop_header
      %s13 = sphi 0, %s17
      %p14 = scmp.ge.s32.totalorder %s13, 4
      %s20 = sphi 0, %s39
      %s21 = sphi 0, %s35
      %s22 = sphi 0, %s31
      %s23 = sphi 0, %s20
      %s24 = sphi 0, %s21
      %s25 = sphi 0, %s22
      %s26 = sphi 0, %s23
      %s27 = sphi 0, %s24
      %s28 = sphi 0, %s25
      %s42 = sphi 0, %s44
      %s45 = sphi 0, %s42
      %s46 = sphi 0, %s45
      %s62 = sphi 0, %s46
      %s68 = sphi 0, %s70
      %s71 = sphi 0, %s68
      %s72 = sphi 0, %s71
      %s88 = sphi 0, %s72
      %s94 = sphi 0, %s96
      %s97 = sphi 0, %s94
      %s98 = sphi 0, %s97
      %s114 = sphi 0, %s98
      %s124 = sphi 0, %s126
      %s127 = sphi 0, %s124
      %s128 = sphi 0, %s127
      %s144 = sphi 0, %s128
    $region4: #{tpu_custom_call.1} parent=1 // loop_header_branch
      %16 = sbr.rel (%p14) target = $region8
    $region5: #{tpu_custom_call.1} parent=1 // loop_body
      %s18 = ssub.s32 %s13, 1
      %s19 = ssub.s32 %s13, 2
      %s29 = sadd.s32 1, %s22
      %p30 = scmp.ge.s32.totalorder %s29, 1
      %s31 = scalar_select %p30, 0, %s29
      %s32 = sadd.s32 1, %s21
      %s33 = scalar_select %p30, %s32, %s21
      %p34 = scmp.ge.s32.totalorder %s33, 1
      %s35 = scalar_select %p34, 0, %s33
      %s36 = sadd.s32 1, %s20
      %s37 = scalar_select %p34, %s36, %s20
      %p38 = scmp.ge.s32.totalorder %s37, 2
      %s39 = scalar_select %p38, 0, %s37
      %s40 = ssub.s32 %s20, %s39
      %p41 = scmp.eq.s32.totalorder %s40, 0
      %s43 = sadd.s32 %s42, 1
      %s44 = scalar_select %p41, %s42, %s43
      %p47 = pneg %p41
      %p48 = scmp.eq.s32.totalorder %s13, 1
      %p49 = por %p47, %p48
      %p50 = scmp.ne.s32.totalorder %s42, %s45
      %p51 = scmp.eq.s32.totalorder %s13, 0
      %p52 = por %p50, %p51
      %p53 = scmp.ne.s32.totalorder %s42, %s45
      %p54 = scmp.eq.s32.totalorder %s18, 1
      %p55 = por %p53, %p54
      %p56 = scmp.ne.s32.totalorder %s45, %s46
      %p57 = scmp.eq.s32.totalorder %s18, 0
      %p58 = por %p56, %p57
      %p59 = scmp.ne.s32.totalorder %s45, %s46
      %p60 = scmp.eq.s32.totalorder %s19, 1
      %p61 = por %p59, %p60
      %p63 = scmp.ne.s32.totalorder %s46, %s62
      %p64 = scmp.eq.s32.totalorder %s19, 0
      %p65 = por %p63, %p64
      %s66 = ssub.s32 %s21, %s35
      %p67 = scmp.eq.s32.totalorder %s66, 0
      %s69 = sadd.s32 %s68, 1
      %s70 = scalar_select %p67, %s68, %s69
      %p73 = pneg %p67
      %p74 = scmp.eq.s32.totalorder %s13, 1
      %p75 = por %p73, %p74
      %p76 = scmp.ne.s32.totalorder %s68, %s71
      %p77 = scmp.eq.s32.totalorder %s13, 0
      %p78 = por %p76, %p77
      %p79 = scmp.ne.s32.totalorder %s68, %s71
      %p80 = scmp.eq.s32.totalorder %s18, 1
      %p81 = por %p79, %p80
      %p82 = scmp.ne.s32.totalorder %s71, %s72
      %p83 = scmp.eq.s32.totalorder %s18, 0
      %p84 = por %p82, %p83
      %p85 = scmp.ne.s32.totalorder %s71, %s72
      %p86 = scmp.eq.s32.totalorder %s19, 1
      %p87 = por %p85, %p86
      %p89 = scmp.ne.s32.totalorder %s72, %s88
      %p90 = scmp.eq.s32.totalorder %s19, 0
      %p91 = por %p89, %p90
      %s92 = ssub.s32 %s21, %s35
      %p93 = scmp.eq.s32.totalorder %s92, 0
      %s95 = sadd.s32 %s94, 1
      %s96 = scalar_select %p93, %s94, %s95
      %p99 = pneg %p93
      %p100 = scmp.eq.s32.totalorder %s13, 1
      %p101 = por %p99, %p100
      %p102 = scmp.ne.s32.totalorder %s94, %s97
      %p103 = scmp.eq.s32.totalorder %s13, 0
      %p104 = por %p102, %p103
      %p105 = scmp.ne.s32.totalorder %s94, %s97
      %p106 = scmp.eq.s32.totalorder %s18, 1
      %p107 = por %p105, %p106
      %p108 = scmp.ne.s32.totalorder %s97, %s98
      %p109 = scmp.eq.s32.totalorder %s18, 0
      %p110 = por %p108, %p109
      %p111 = scmp.ne.s32.totalorder %s97, %s98
      %p112 = scmp.eq.s32.totalorder %s19, 1
      %p113 = por %p111, %p112
      %p115 = scmp.ne.s32.totalorder %s98, %s114
      %p116 = scmp.eq.s32.totalorder %s19, 0
      %p117 = por %p115, %p116
      %s118 = ssub.s32 %s20, %s39
      %s119 = ssub.s32 %s22, %s31
      %s120 = sor.u32 %s118, %s119
      %s121 = ssub.s32 %s21, %s35
      %s122 = sor.u32 %s120, %s121
      %p123 = scmp.eq.s32.totalorder %s122, 0
      %s125 = sadd.s32 %s124, 1
      %s126 = scalar_select %p123, %s124, %s125
      %p129 = pneg %p123
      %p130 = scmp.eq.s32.totalorder %s13, 1
      %p131 = por %p129, %p130
      %p132 = scmp.ne.s32.totalorder %s124, %s127
      %p133 = scmp.eq.s32.totalorder %s13, 0
      %p134 = por %p132, %p133
      %p135 = scmp.ne.s32.totalorder %s124, %s127
      %p136 = scmp.eq.s32.totalorder %s18, 1
      %p137 = por %p135, %p136
      %p138 = scmp.ne.s32.totalorder %s127, %s128
      %p139 = scmp.eq.s32.totalorder %s18, 0
      %p140 = por %p138, %p139
      %p141 = scmp.ne.s32.totalorder %s127, %s128
      %p142 = scmp.eq.s32.totalorder %s19, 1
      %p143 = por %p141, %p142
      %p145 = scmp.ne.s32.totalorder %s128, %s144
      %p146 = scmp.eq.s32.totalorder %s19, 0
      %p147 = por %p145, %p146
      %p148 = scmp.le.s32.totalorder 1, %s13
      %p149 = scmp.lt.s32.totalorder %s13, 3
      %p150 = pnand %p148, %p149
      %p151 = pneg %p150
      // Predicated region
      $region9: #{tpu_custom_call.1} parent=5 // pred_check
        _
      $region10: #{tpu_custom_call.1} parent=5 // pred_check_branch
        %153 = sbr.rel (%p150) target = $region12
      $region11: #{tpu_custom_call.1} parent=5 // pred_region
        %s154 = ssub.s32 %s13, 1
        // Predicated region
        $region13: #{tpu_custom_call.1} parent=11 // pred_check
          %p155 = pneg %p84
        $region14: #{tpu_custom_call.1} parent=11 // pred_check_branch
          %157 = sbr.rel (%p155) target = $region16
        $region15: #{tpu_custom_call.1} parent=11 // pred_region
          %159 = vsyncadd [#allocation3], 0
          %s160 = smul.addr %s24, 8
          %s161 = scalar_lea.hbm %s1, %s160
          %s162 = sshll.u32 %s161, 4
          %s163 = int_to_ptr.hbm [resolvable:$true] %s162
          %s164 = sshll.u32 [#allocation2], 4
          %s165 = int_to_ptr.vmem [resolvable:$true] %s164
          %170 = dma.hbm_to_vmem [thread:$0]  %s163, 1536, %s165, [#allocation3], 128, 128, 8
        $region16: #{tpu_custom_call.1} parent=11 // pred_fallthru
          _
        // Predicated region
        $region17: #{tpu_custom_call.1} parent=11 // pred_check
          %p171 = pneg %p110
        $region18: #{tpu_custom_call.1} parent=11 // pred_check_branch
          %173 = sbr.rel (%p171) target = $region20
        $region19: #{tpu_custom_call.1} parent=11 // pred_region
          %p174 = scmp.lt.s32.totalorder %s24, 0
          %s175 = scalar_select %p174, %s24, 0
          %s176 = scalar_lea.vmem %s2, %s175
        $region20: #{tpu_custom_call.1} parent=11 // pred_fallthru
          _
      $region12: #{tpu_custom_call.1} parent=5 // pred_fallthru
        _
      %p177 = scmp.lt.s32.totalorder %s13, 2
      // Predicated region
      $region21: #{tpu_custom_call.1} parent=5 // pred_check
        %p178 = pneg %p177
      $region22: #{tpu_custom_call.1} parent=5 // pred_check_branch
        %180 = sbr.rel (%p178) target = $region24
      $region23: #{tpu_custom_call.1} parent=5 // pred_region
        // Predicated region
        $region25: #{tpu_custom_call.1} parent=23 // pred_check
          %p181 = pneg %p52
        $region26: #{tpu_custom_call.1} parent=23 // pred_check_branch
          %183 = sbr.rel (%p181) target = $region28
        $region27: #{tpu_custom_call.1} parent=23 // pred_region
          %p184 = scmp.lt.s32.totalorder %s20, 1
          %s185 = scalar_select %p184, %s20, 1
          %s186 = smul.addr %s185, 3
          %s187 = smul.addr %s186, 8
          %s188 = scalar_lea.vmem %s0, %s187
        $region28: #{tpu_custom_call.1} parent=23 // pred_fallthru
          _
      $region24: #{tpu_custom_call.1} parent=5 // pred_fallthru
        _
      %p189 = scmp.le.s32.totalorder 1, %s13
      %p190 = scmp.lt.s32.totalorder %s13, 3
      %p191 = pnand %p189, %p190
      %p192 = pneg %p191
      // Predicated region
      $region29: #{tpu_custom_call.1} parent=5 // pred_check
        _
      $region30: #{tpu_custom_call.1} parent=5 // pred_check_branch
        %194 = sbr.rel (%p191) target = $region32
      $region31: #{tpu_custom_call.1} parent=5 // pred_region
        %s195 = ssub.s32 %s13, 1
        // Predicated region
        $region33: #{tpu_custom_call.1} parent=31 // pred_check
          %p196 = pneg %p84
        $region34: #{tpu_custom_call.1} parent=31 // pred_check_branch
          %198 = sbr.rel (%p196) target = $region36
        $region35: #{tpu_custom_call.1} parent=31 // pred_region
          %200 = dma.done [#allocation3], 1536
        $region36: #{tpu_custom_call.1} parent=31 // pred_fallthru
          _
        %p201 = scmp.lt.s32.totalorder %s23, 1
        %s202 = scalar_select %p201, %s23, 1
        %s203 = smul.addr %s202, 3
        %s204 = smul.addr %s203, 8
        %s205 = scalar_lea.vmem %s0, %s204
        %p206 = pneg %p58
        %p207 = pneg %p55
        %p208 = pneg %p84
        %p209 = pneg %p81
        %p210 = scmp.lt.s32.totalorder %s24, 0
        %s211 = scalar_select %p210, %s24, 0
        %s212 = scalar_lea.vmem %s2, %s211
        %p213 = pneg %p110
        %p214 = pneg %p107
        %p215 = pneg %p140
        %p216 = pneg %p137
        %s217 = sand.u32 %s127, 1
        %s218 = scalar_lea.sflag [#allocation4], %s217
        %s219 = sand.u32 %s127, 1
        %s220 = smul.addr %s219, 16
        %s221 = scalar_lea.vmem [#allocation5], %s220
        %p222 = scmp.lt.s32.totalorder %s23, 1
        %s223 = scalar_select %p222, %s23, 1
        %s224 = smul.addr %s223, 3
        %s225 = smul.addr %s224, 8
        %s226 = scalar_lea.vmem %s0, %s225
        %p227 = scmp.lt.s32.totalorder %s24, 0
        %s228 = scalar_select %p227, %s24, 0
        %s229 = scalar_lea.vmem %s2, %s228
        %s230 = smul.u32 2, %s25
        %s231 = smul.u32 %s25, 16
        %s232 = scalar_lea.vmem %s226, %s231
        %v233 = vld [vmem:[%s232] sm:$0xff]
        %v234 = vld [vmem:[%s232 + $0x8] sm:$0xff]
        %v235 = vld [vmem:[#allocation2] sm:$0xff]
        %v236 = vld [vmem:[#allocation2 + $0x8] sm:$0xff]
        %v237 = vld [vmem:[#allocation2 + $0x10] sm:$0xff]
        %v238 = vld [vmem:[#allocation2 + $0x18] sm:$0xff]
        %s239 = sadd.s32 %s231, 1
        %s240 = scalar_lea.vmem %s226, %s239
        %v241 = vld [vmem:[%s240] sm:$0xff]
        %v242 = vld [vmem:[%s240 + $0x8] sm:$0xff]
        %s243 = scalar_lea.vmem [#allocation2], 32
        %v244 = vld [vmem:[%s243] sm:$0xff]
        %v245 = vld [vmem:[%s243 + $0x8] sm:$0xff]
        %v246 = vld [vmem:[%s243 + $0x10] sm:$0xff]
        %v247 = vld [vmem:[%s243 + $0x18] sm:$0xff]
        %vm248 = vcmask 261120
        %v250 = vsel %vm248, %v241, 0
        %v253 = vsel %vm248, %v242, 0
        %255 = vmatpush.msra.mxu0 0.0
        %256 = vmatpush.msra.mxu0 0.0
        %257 = vmatpush.msra.mxu0 0.0
        %258 = vmatpush.msra.mxu0 0.0
        %259 = vmatpush.msra.mxu0 0.0
        %260 = vmatpush.msra.mxu0 0.0
        %261 = vmatpush.msra.mxu0 0.0
        %262 = vmatpush.msra.mxu0 0.0
        %263 = vmatpush.msra.mxu0 0.0
        %264 = vmatpush.msra.mxu0 0.0
        %265 = vmatpush.msra.mxu0 0.0
        %266 = vmatpush.msra.mxu0 0.0
        %267 = vmatpush.msra.mxu0 %v247
        %268 = vmatpush.msra.mxu0 %v246
        %269 = vmatpush.msra.mxu0 %v245
        %270 = vmatpush.msra.mxu0 %v244
        %271 = vmatmul.f32.gmra.mxu0 %v250
        %v272 = vpop.f32.mrf.mxu0
        %v273 = vadd.f32 0.0, %v272
        %274 = vmatmul.f32.gmra.mxu0 %v253
        %v275 = vpop.f32.mrf.mxu0
        %v276 = vadd.f32 0.0, %v275
        %277 = vdwg.mxu0
        %v279 = vsel %vm248, %v233, 0
        %v282 = vsel %vm248, %v234, 0
        %284 = vmatpush.msra.mxu0 0.0
        %285 = vmatpush.msra.mxu0 0.0
        %286 = vmatpush.msra.mxu0 0.0
        %287 = vmatpush.msra.mxu0 0.0
        %288 = vmatpush.msra.mxu0 0.0
        %289 = vmatpush.msra.mxu0 0.0
        %290 = vmatpush.msra.mxu0 0.0
        %291 = vmatpush.msra.mxu0 0.0
        %292 = vmatpush.msra.mxu0 0.0
        %293 = vmatpush.msra.mxu0 0.0
        %294 = vmatpush.msra.mxu0 0.0
        %295 = vmatpush.msra.mxu0 0.0
        %296 = vmatpush.msra.mxu0 %v238
        %297 = vmatpush.msra.mxu0 %v237
        %298 = vmatpush.msra.mxu0 %v236
        %299 = vmatpush.msra.mxu0 %v235
        %300 = vmatmul.f32.gmra.mxu0 %v279
        %v301 = vpop.f32.mrf.mxu0
        %v302 = vadd.f32 %v273, %v301
        %303 = vmatmul.f32.gmra.mxu0 %v282
        %v304 = vpop.f32.mrf.mxu0
        %v305 = vadd.f32 %v276, %v304
        %306 = vdwg.mxu0
        %s307 = sadd.s32 %s231, 2
        %s308 = scalar_lea.vmem %s226, %s307
        %v309 = vld [vmem:[%s308] sm:$0xff]
        %v310 = vld [vmem:[%s308 + $0x8] sm:$0xff]
        %s311 = scalar_lea.vmem [#allocation2], 64
        %v312 = vld [vmem:[%s311] sm:$0xff]
        %v313 = vld [vmem:[%s311 + $0x8] sm:$0xff]
        %v314 = vld [vmem:[%s311 + $0x10] sm:$0xff]
        %v315 = vld [vmem:[%s311 + $0x18] sm:$0xff]
        %v317 = vsel %vm248, %v309, 0
        %v320 = vsel %vm248, %v310, 0
        %322 = vmatpush.msra.mxu0 0.0
        %323 = vmatpush.msra.mxu0 0.0
        %324 = vmatpush.msra.mxu0 0.0
        %325 = vmatpush.msra.mxu0 0.0
        %326 = vmatpush.msra.mxu0 0.0
        %327 = vmatpush.msra.mxu0 0.0
        %328 = vmatpush.msra.mxu0 0.0
        %329 = vmatpush.msra.mxu0 0.0
        %330 = vmatpush.msra.mxu0 0.0
        %331 = vmatpush.msra.mxu0 0.0
        %332 = vmatpush.msra.mxu0 0.0
        %333 = vmatpush.msra.mxu0 0.0
        %334 = vmatpush.msra.mxu0 %v315
        %335 = vmatpush.msra.mxu0 %v314
        %336 = vmatpush.msra.mxu0 %v313
        %337 = vmatpush.msra.mxu0 %v312
        %338 = vmatmul.f32.gmra.mxu0 %v317
        %v339 = vpop.f32.mrf.mxu0
        %v340 = vadd.f32 0.0, %v339
        %341 = vmatmul.f32.gmra.mxu0 %v320
        %v342 = vpop.f32.mrf.mxu0
        %v343 = vadd.f32 0.0, %v342
        %344 = vdwg.mxu0
        %v345 = vadd.f32 %v302, %v340
        %v346 = vadd.f32 %v305, %v343
        %v347 = vld [vmem:[%s229] sm:$0x1]
        %v349 = vperm.slane %v347, 0
        %v351 = vadd.f32 %v345, %v349
        %v352 = vadd.f32 %v346, %v349
        %vm353 = vcmask 523264
        %354 = vst.msk [vmem:[%s221] sm:$0xff] %vm353, %v351
        %355 = vst.msk [vmem:[%s221 + $0x8] sm:$0xff] %vm353, %v352
        %s356 = sand.u32 %s127, 1
        %s357 = scalar_lea.sflag [#allocation4], %s356
        %s358 = sand.u32 %s127, 1
        %s359 = smul.addr %s358, 16
        %s360 = scalar_lea.vmem [#allocation5], %s359
        // Predicated region
        $region37: #{tpu_custom_call.1} parent=31 // pred_check
          %p361 = pneg %p137
        $region38: #{tpu_custom_call.1} parent=31 // pred_check_branch
          %363 = sbr.rel (%p361) target = $region40
        $region39: #{tpu_custom_call.1} parent=31 // pred_region
          %s364 = smul.u32 2, %s25
          %366 = vsyncadd %s357, 0
          %s367 = sadd.s32 %s24, %s364
          %s368 = smul.addr %s23, 2
          %s369 = sadd.s32 %s367, %s368
          %s370 = smul.addr %s369, 8
          %s371 = scalar_lea.hbm %s3, %s370
          %s372 = sshll.u32 %s360, 4
          %s373 = int_to_ptr.vmem [resolvable:$true] %s372
          %s374 = sshll.u32 %s371, 4
          %s375 = int_to_ptr.hbm [resolvable:$true] %s374
          %380 = dma.vmem_to_hbm [thread:$0]  %s373, 256, %s375, %s357, 128, 128, 8
        $region40: #{tpu_custom_call.1} parent=31 // pred_fallthru
          _
      $region32: #{tpu_custom_call.1} parent=5 // pred_fallthru
        _
      %p381 = scmp.le.s32.totalorder 2, %s13
      // Predicated region
      $region41: #{tpu_custom_call.1} parent=5 // pred_check
        %p382 = pneg %p381
      $region42: #{tpu_custom_call.1} parent=5 // pred_check_branch
        %384 = sbr.rel (%p382) target = $region44
      $region43: #{tpu_custom_call.1} parent=5 // pred_region
        %s385 = ssub.s32 %s13, 2
        // Predicated region
        $region45: #{tpu_custom_call.1} parent=43 // pred_check
          %p386 = pneg %p143
        $region46: #{tpu_custom_call.1} parent=43 // pred_check_branch
          %388 = sbr.rel (%p386) target = $region48
        $region47: #{tpu_custom_call.1} parent=43 // pred_region
          %s389 = sand.u32 %s128, 1
          %s390 = scalar_lea.sflag [#allocation4], %s389
          %s391 = sand.u32 %s128, 1
          %s392 = smul.addr %s391, 16
          %s393 = scalar_lea.vmem [#allocation5], %s392
          %395 = dma.done %s390, 256
        $region48: #{tpu_custom_call.1} parent=43 // pred_fallthru
          _
      $region44: #{tpu_custom_call.1} parent=5 // pred_fallthru
        _
    $region6: #{tpu_custom_call.1} parent=1 // loop_footer
      %s17 = sadd.s32 1, %s13
    $region7: #{tpu_custom_call.1} parent=1 // loop_footer_branch
      %12 = sbr.rel target = $region3
    $region8: #{tpu_custom_call.1} parent=1 // loop_exit
      _
    %396 = vsyncpa [#allocation3], 1
    %s397 = scalar_lea.sflag [#allocation3], 1
    %398 = vsyncpa %s397, 1
    %399 = vsyncpa [#allocation4], 1
    %s400 = scalar_lea.sflag [#allocation4], 1
    %401 = vsyncpa %s400, 1

</llo_original>
